<compile_context>
chip_gen: v5e
topology: v5e:2x2
jax: 0.10.0
libtpu: 0.0.40
codegen_flags: <defaults>
</compile_context>

<pallas_src>
import jax
import jax.numpy as jnp
from jax.experimental import pallas as pl
from jax.experimental.pallas import tpu as pltpu


def policy_kernel(x_ref, w1_ref, b1_ref, w2_ref, b2_ref, w3_ref, b3_ref, mu_ref):
    # hidden layer 1: Linear + ReLU (MXU matmul, f32 accumulate)
    h1 = jnp.dot(x_ref[...], w1_ref[...], preferred_element_type=jnp.float32)
    h1 = jnp.maximum(h1 + b1_ref[...], 0.0)
    # hidden layer 2: Linear + ReLU
    h2 = jnp.dot(h1, w2_ref[...], preferred_element_type=jnp.float32)
    h2 = jnp.maximum(h2 + b2_ref[...], 0.0)
    # mu head: Linear -> tanh -> * 2
    m = jnp.dot(h2, w3_ref[...], preferred_element_type=jnp.float32)
    mu_ref[...] = 2.0 * jnp.tanh(m + b3_ref[...])


def policy_forward(x, params, *, max_tb=1024):
    """Fused PolicyNet forward. Returns (mu [B, act_dim], sigma [act_dim]).

    Batch is tiled into TB-row blocks (TB <= max_tb, multiple of 8 sublanes);
    weights/biases are resident across the grid. max_tb=1024 keeps the f32
    footprint (h1/h2 intermediates + double-buffered x/mu) comfortably inside
    v7x's 64 MiB VMEM as well as v5e/v6e's 128 MiB.
    """
    w1, b1, w2, b2, w3, b3, logs = params
    B, state_dim = x.shape
    hidden = w1.shape[1]
    act_dim = w3.shape[1]

    # Tile size: multiple of 8 (sublane constraint), capped at max_tb.
    b_round8 = pl.cdiv(B, 8) * 8
    TB = min(max_tb, b_round8)
    B_pad = pl.cdiv(B, TB) * TB
    if B_pad != B:
        x = jnp.pad(x, ((0, B_pad - B), (0, 0)))

    grid = (B_pad // TB,)
    const2d = lambda i: (0, 0)  # weights/biases: same block every grid step

    mu = pl.pallas_call(
        policy_kernel,
        out_shape=jax.ShapeDtypeStruct((B_pad, act_dim), jnp.float32),
        grid=grid,
        in_specs=[
            pl.BlockSpec((TB, state_dim), lambda i: (i, 0)),   # x: streamed
            pl.BlockSpec((state_dim, hidden), const2d),        # W1: resident
            pl.BlockSpec((1, hidden), const2d),                # b1
            pl.BlockSpec((hidden, hidden), const2d),           # W2
            pl.BlockSpec((1, hidden), const2d),                # b2
            pl.BlockSpec((hidden, act_dim), const2d),          # W3
            pl.BlockSpec((1, act_dim), const2d),               # b3
        ],
        out_specs=pl.BlockSpec((TB, act_dim), lambda i: (i, 0)),
        compiler_params=pltpu.CompilerParams(
            dimension_semantics=("parallel",),  # shard batch tiles across TCs (v7x)
        ),
    )(x, w1, b1, w2, b2, w3, b3)

    mu = mu[:B]
    # sigma is independent of x: a handful of scalars, computed once in plain
    # JAX instead of being recomputed / re-stored every grid step.
    sigma = jnp.sqrt(jax.nn.softplus(logs) + 1e-4)
    return mu, sigma


def init_params(key, state_dim, act_dim, hidden=256):
    """Deterministic init mimicking PyTorch's default Linear init (uniform +-1/sqrt(fan_in))."""
    ks = jax.random.split(key, 6)

    def linear(kw, kb, fan_in, fan_out):
        bound = 1.0 / jnp.sqrt(fan_in)
        w = jax.random.uniform(kw, (fan_in, fan_out), jnp.float32, -bound, bound)
        b = jax.random.uniform(kb, (1, fan_out), jnp.float32, -bound, bound)
        return w, b

    w1, b1 = linear(ks[0], ks[1], state_dim, hidden)
    w2, b2 = linear(ks[2], ks[3], hidden, hidden)
    w3, b3 = linear(ks[4], ks[5], hidden, act_dim)
    logs = jnp.zeros((act_dim,), jnp.float32)  # nn.Parameter(torch.zeros(act_dim))
    return (w1, b1, w2, b2, w3, b3, logs)


def policy_forward_ref(x, params):
    w1, b1, w2, b2, w3, b3, logs = params
    h = jnp.maximum(x @ w1 + b1, 0.0)
    h = jnp.maximum(h @ w2 + b2, 0.0)
    mu = 2.0 * jnp.tanh(h @ w3 + b3)
    sigma = jnp.sqrt(jax.nn.softplus(logs) + 1e-4)
    return mu, sigma


if __name__ == "__main__":
    key = jax.random.PRNGKey(0)
    k_param, k_x = jax.random.split(key)

    B, state_dim, act_dim = 8, 32, 4
    params = init_params(k_param, state_dim, act_dim)
    x = jax.random.normal(k_x, (B, state_dim), jnp.float32)

    mu, sigma = jax.jit(policy_forward)(x, params)
    jax.block_until_ready((mu, sigma))

    # sanity check against plain-JAX reference
    mu_ref, sigma_ref = policy_forward_ref(x, params)
    assert mu.shape == (B, act_dim) and sigma.shape == (act_dim,)
    assert jnp.allclose(mu, mu_ref, atol=1e-4), "mu mismatch"
    assert jnp.allclose(sigma, sigma_ref, atol=1e-6), "sigma mismatch"

    print("KERNEL_OK")
</pallas_src>

<mosaic_0001>
module attributes {stable_mosaic.version = 11 : i64} {
  func.func @policy_kernel(%arg0: i32, %arg1: memref<8x32xf32, #tpu.memory_space<vmem>>, %arg2: memref<32x256xf32, #tpu.memory_space<vmem>>, %arg3: memref<1x256xf32, #tpu.memory_space<vmem>>, %arg4: memref<256x256xf32, #tpu.memory_space<vmem>>, %arg5: memref<1x256xf32, #tpu.memory_space<vmem>>, %arg6: memref<256x4xf32, #tpu.memory_space<vmem>>, %arg7: memref<1x4xf32, #tpu.memory_space<vmem>>, %arg8: memref<8x4xf32, #tpu.memory_space<vmem>>) attributes {dimension_semantics = [#tpu.dimension_semantics<parallel>], iteration_bounds = array<i64: 1>, scalar_prefetch = 0 : i64, scratch_operands = 0 : i64, tpu.core_type = #tpu.core_type<tc>, window_params = [{transform_indices = @transform_0, window_bounds = array<i64: 8, 32>}, {pipeline_mode = #tpu.pipeline_mode<synchronous>, transform_indices = @transform_1, window_bounds = array<i64: 32, 256>}, {pipeline_mode = #tpu.pipeline_mode<synchronous>, transform_indices = @transform_2, window_bounds = array<i64: 1, 256>}, {pipeline_mode = #tpu.pipeline_mode<synchronous>, transform_indices = @transform_3, window_bounds = array<i64: 256, 256>}, {pipeline_mode = #tpu.pipeline_mode<synchronous>, transform_indices = @transform_4, window_bounds = array<i64: 1, 256>}, {pipeline_mode = #tpu.pipeline_mode<synchronous>, transform_indices = @transform_5, window_bounds = array<i64: 256, 4>}, {pipeline_mode = #tpu.pipeline_mode<synchronous>, transform_indices = @transform_6, window_bounds = array<i64: 1, 4>}, {transform_indices = @transform_7, window_bounds = array<i64: 8, 4>}]} {
    %c0 = arith.constant 0 : index
    %c0_0 = arith.constant 0 : index
    %0 = vector.load %arg1[%c0, %c0_0] : memref<8x32xf32, #tpu.memory_space<vmem>>, vector<8x32xf32>
    %c0_1 = arith.constant 0 : index
    %c0_2 = arith.constant 0 : index
    %1 = vector.load %arg2[%c0_1, %c0_2] : memref<32x256xf32, #tpu.memory_space<vmem>>, vector<32x256xf32>
    %cst = arith.constant dense<0.000000e+00> : vector<8x256xf32>
    %2 = tpu.matmul %0, %1, %cst {dimension_numbers = #tpu.dot_dimension_numbers<[1], [0], [0], [1], [0, 0, 1, 1], [], []>} : vector<8x32xf32>, vector<32x256xf32>, vector<8x256xf32> -> vector<8x256xf32>
    %c0_3 = arith.constant 0 : index
    %c0_4 = arith.constant 0 : index
    %3 = vector.load %arg3[%c0_3, %c0_4] : memref<1x256xf32, #tpu.memory_space<vmem>>, vector<1x256xf32>
    %4 = vector.broadcast %3 : vector<1x256xf32> to vector<8x256xf32>
    %5 = arith.addf %2, %4 : vector<8x256xf32>
    %cst_5 = arith.constant 0.000000e+00 : f32
    %6 = vector.broadcast %cst_5 : f32 to vector<8x256xf32>
    %7 = arith.maximumf %5, %6 : vector<8x256xf32>
    %c0_6 = arith.constant 0 : index
    %c0_7 = arith.constant 0 : index
    %8 = vector.load %arg4[%c0_6, %c0_7] : memref<256x256xf32, #tpu.memory_space<vmem>>, vector<256x256xf32>
    %cst_8 = arith.constant dense<0.000000e+00> : vector<8x256xf32>
    %9 = tpu.matmul %7, %8, %cst_8 {dimension_numbers = #tpu.dot_dimension_numbers<[1], [0], [0], [1], [0, 0, 1, 1], [], []>} : vector<8x256xf32>, vector<256x256xf32>, vector<8x256xf32> -> vector<8x256xf32>
    %c0_9 = arith.constant 0 : index
    %c0_10 = arith.constant 0 : index
    %10 = vector.load %arg5[%c0_9, %c0_10] : memref<1x256xf32, #tpu.memory_space<vmem>>, vector<1x256xf32>
    %11 = vector.broadcast %10 : vector<1x256xf32> to vector<8x256xf32>
    %12 = arith.addf %9, %11 : vector<8x256xf32>
    %cst_11 = arith.constant 0.000000e+00 : f32
    %13 = vector.broadcast %cst_11 : f32 to vector<8x256xf32>
    %14 = arith.maximumf %12, %13 : vector<8x256xf32>
    %c0_12 = arith.constant 0 : index
    %c0_13 = arith.constant 0 : index
    %15 = vector.load %arg6[%c0_12, %c0_13] : memref<256x4xf32, #tpu.memory_space<vmem>>, vector<256x4xf32>
    %cst_14 = arith.constant dense<0.000000e+00> : vector<8x4xf32>
    %16 = tpu.matmul %14, %15, %cst_14 {dimension_numbers = #tpu.dot_dimension_numbers<[1], [0], [0], [1], [0, 0, 1, 1], [], []>} : vector<8x256xf32>, vector<256x4xf32>, vector<8x4xf32> -> vector<8x4xf32>
    %c0_15 = arith.constant 0 : index
    %c0_16 = arith.constant 0 : index
    %17 = vector.load %arg7[%c0_15, %c0_16] : memref<1x4xf32, #tpu.memory_space<vmem>>, vector<1x4xf32>
    %18 = vector.broadcast %17 : vector<1x4xf32> to vector<8x4xf32>
    %19 = arith.addf %16, %18 : vector<8x4xf32>
    %20 = math.tanh %19 : vector<8x4xf32>
    %cst_17 = arith.constant 2.000000e+00 : f32
    %21 = vector.broadcast %cst_17 : f32 to vector<8x4xf32>
    %22 = arith.mulf %21, %20 : vector<8x4xf32>
    %c0_18 = arith.constant 0 : index
    %c0_19 = arith.constant 0 : index
    %23 = vector.load %arg8[%c0_18, %c0_19] : memref<8x4xf32, #tpu.memory_space<vmem>>, vector<8x4xf32>
    tpu.vector_store %arg8[%c0_18, %c0_19], %22 {strides = array<i32>} : memref<8x4xf32, #tpu.memory_space<vmem>>, vector<8x4xf32>,
    return
  }
  func.func @transform_0(%arg0: i32) -> (i32, i32) {
    %c0_i32 = arith.constant 0 : i32
    %c0_i32_0 = arith.constant 0 : i32
    return %arg0, %c0_i32 : i32, i32
  }
  func.func @transform_1(%arg0: i32) -> (i32, i32) {
    %c0_i32 = arith.constant 0 : i32
    %c0_i32_0 = arith.constant 0 : i32
    %c0_i32_1 = arith.constant 0 : i32
    return %c0_i32, %c0_i32_0 : i32, i32
  }
  func.func @transform_2(%arg0: i32) -> (i32, i32) {
    %c0_i32 = arith.constant 0 : i32
    %c0_i32_0 = arith.constant 0 : i32
    %c0_i32_1 = arith.constant 0 : i32
    return %c0_i32, %c0_i32_0 : i32, i32
  }
  func.func @transform_3(%arg0: i32) -> (i32, i32) {
    %c0_i32 = arith.constant 0 : i32
    %c0_i32_0 = arith.constant 0 : i32
    %c0_i32_1 = arith.constant 0 : i32
    return %c0_i32, %c0_i32_0 : i32, i32
  }
  func.func @transform_4(%arg0: i32) -> (i32, i32) {
    %c0_i32 = arith.constant 0 : i32
    %c0_i32_0 = arith.constant 0 : i32
    %c0_i32_1 = arith.constant 0 : i32
    return %c0_i32, %c0_i32_0 : i32, i32
  }
  func.func @transform_5(%arg0: i32) -> (i32, i32) {
    %c0_i32 = arith.constant 0 : i32
    %c0_i32_0 = arith.constant 0 : i32
    %c0_i32_1 = arith.constant 0 : i32
    return %c0_i32, %c0_i32_0 : i32, i32
  }
  func.func @transform_6(%arg0: i32) -> (i32, i32) {
    %c0_i32 = arith.constant 0 : i32
    %c0_i32_0 = arith.constant 0 : i32
    %c0_i32_1 = arith.constant 0 : i32
    return %c0_i32, %c0_i32_0 : i32, i32
  }
  func.func @transform_7(%arg0: i32) -> (i32, i32) {
    %c0_i32 = arith.constant 0 : i32
    %c0_i32_0 = arith.constant 0 : i32
    return %arg0, %c0_i32 : i32, i32
  }
}

</mosaic_0001>

<llo_original>
// kernel: policy_forward.1
$region0: #{policy_forward.1}
  #allocation0 [shape = 'u32[]', space=smem, size = 0x4, offset = 0x4, fixed_abs, tag = 'smem constant byte address 0x4 - core index']
  #allocation1 [shape = 'u32[72,128]{1,0:T(1,128)}', space=vmem, size = 0x9000, scoped, tag = 'internal scratch']
  %s0 = inlined_call_operand.vmem [shape: f32[8,32], index: 0, kind: input, shape index: {}]
  %s1 = inlined_call_operand.vmem [shape: f32[32,256], index: 1, kind: input, shape index: {}]
  %s2 = inlined_call_operand.vmem [shape: f32[1,256], index: 2, kind: input, shape index: {}]
  %s3 = inlined_call_operand.hbm [shape: f32[256,256], index: 3, kind: input, shape index: {}]
  %s4 = inlined_call_operand.vmem [shape: f32[1,256], index: 4, kind: input, shape index: {}]
  %s5 = inlined_call_operand.vmem [shape: f32[256,4], index: 5, kind: input, shape index: {}]
  %s6 = inlined_call_operand.vmem [shape: f32[1,4], index: 6, kind: input, shape index: {}]
  %s7 = inlined_call_operand.vmem [shape: f32[8,4], index: 7, kind: output, shape index: {}]
  %s8 = sld [smem:[#allocation0]]
  $region42: #{policy_forward.1} parent=0
    _
  %s10 = ssub.s32 1, %s8
  %s11 = scalar_select 0, %s10, %s8
  $region1: #{policy_forward.1} parent=0
    #allocation2 [shape = 'u8[262144]{0}', space=vmem, size = 0x40000, scoped, tag = 'input window, operand 3, single buffered']
    #allocation3 [shape = 's32[1]{0}', space=sflag, size = 0x4, scoped, tag = 'scoped memory for policy_forward.1']
    %12 = vsyncpa [#allocation3], 0
    // Predicated region
    $region2: #{policy_forward.1} parent=1 // pred_check
      _
    $region3: #{policy_forward.1} parent=1 // pred_check_branch
      %14 = sbr.rel (0) target = $region5
    $region4: #{policy_forward.1} parent=1 // pred_region
      _
    $region5: #{policy_forward.1} parent=1 // pred_fallthru
      _
    // Predicated region
    $region6: #{policy_forward.1} parent=1 // pred_check
      _
    $region7: #{policy_forward.1} parent=1 // pred_check_branch
      %16 = sbr.rel (0) target = $region9
    $region8: #{policy_forward.1} parent=1 // pred_region
      _
    $region9: #{policy_forward.1} parent=1 // pred_fallthru
      _
    // Predicated region
    $region10: #{policy_forward.1} parent=1 // pred_check
      _
    $region11: #{policy_forward.1} parent=1 // pred_check_branch
      %18 = sbr.rel (0) target = $region13
    $region12: #{policy_forward.1} parent=1 // pred_region
      _
    $region13: #{policy_forward.1} parent=1 // pred_fallthru
      _
    // Predicated region
    $region14: #{policy_forward.1} parent=1 // pred_check
      _
    $region15: #{policy_forward.1} parent=1 // pred_check_branch
      %20 = sbr.rel (0) target = $region17
    $region16: #{policy_forward.1} parent=1 // pred_region
      %22 = vsyncadd [#allocation3], 0
      %s23 = sshll.u32 %s3, 4
      %s24 = int_to_ptr.hbm [resolvable:$true] %s23
      %s25 = sshll.u32 [#allocation2], 4
      %s26 = int_to_ptr.vmem [resolvable:$true] %s25
      %31 = dma.hbm_to_vmem [thread:$0]  %s24, 8192, %s26, [#allocation3], 256, 256, 16
    $region17: #{policy_forward.1} parent=1 // pred_fallthru
      _
    // Predicated region
    $region18: #{policy_forward.1} parent=1 // pred_check
      _
    $region19: #{policy_forward.1} parent=1 // pred_check_branch
      %33 = sbr.rel (0) target = $region21
    $region20: #{policy_forward.1} parent=1 // pred_region
      _
    $region21: #{policy_forward.1} parent=1 // pred_fallthru
      _
    // Predicated region
    $region22: #{policy_forward.1} parent=1 // pred_check
      _
    $region23: #{policy_forward.1} parent=1 // pred_check_branch
      %35 = sbr.rel (0) target = $region25
    $region24: #{policy_forward.1} parent=1 // pred_region
      _
    $region25: #{policy_forward.1} parent=1 // pred_fallthru
      _
    // Predicated region
    $region26: #{policy_forward.1} parent=1 // pred_check
      _
    $region27: #{policy_forward.1} parent=1 // pred_check_branch
      %37 = sbr.rel (0) target = $region29
    $region28: #{policy_forward.1} parent=1 // pred_region
      _
    $region29: #{policy_forward.1} parent=1 // pred_fallthru
      _
    // Predicated region
    $region30: #{policy_forward.1} parent=1 // pred_check
      _
    $region31: #{policy_forward.1} parent=1 // pred_check_branch
      %39 = sbr.rel (0) target = $region33
    $region32: #{policy_forward.1} parent=1 // pred_region
      %41 = dma.done [#allocation3], 8192
    $region33: #{policy_forward.1} parent=1 // pred_fallthru
      _
    %v42 = vld [vmem:[%s0] sm:$0xff]
    %v43 = vld [vmem:[%s1] sm:$0xff]
    %v44 = vld [vmem:[%s1 + $0x8] sm:$0xff]
    %v45 = vld [vmem:[%s1 + $0x10] sm:$0xff]
    %v46 = vld [vmem:[%s1 + $0x18] sm:$0xff]
    %v47 = vld [vmem:[%s1 + $0x20] sm:$0xff]
    %v48 = vld [vmem:[%s1 + $0x28] sm:$0xff]
    %v49 = vld [vmem:[%s1 + $0x30] sm:$0xff]
    %v50 = vld [vmem:[%s1 + $0x38] sm:$0xff]
    %v51 = vld [vmem:[%s2] sm:$0x3]
    %v53 = vperm.slane %v51, 0
    %v54 = vperm.slane %v51, 1
    %vm57 = vcmask 261120
    %v59 = vsel %vm57, %v42, 0
    %61 = vmatpush.msra.mxu0 0.0
    %62 = vmatpush.msra.mxu0 0.0
    %63 = vmatpush.msra.mxu0 0.0
    %64 = vmatpush.msra.mxu0 0.0
    %65 = vmatpush.msra.mxu0 0.0
    %66 = vmatpush.msra.mxu0 0.0
    %67 = vmatpush.msra.mxu0 0.0
    %68 = vmatpush.msra.mxu0 0.0
    %69 = vmatpush.msra.mxu0 0.0
    %70 = vmatpush.msra.mxu0 0.0
    %71 = vmatpush.msra.mxu0 0.0
    %72 = vmatpush.msra.mxu0 0.0
    %73 = vmatpush.msra.mxu0 %v49
    %74 = vmatpush.msra.mxu0 %v47
    %75 = vmatpush.msra.mxu0 %v45
    %76 = vmatpush.msra.mxu0 %v43
    %77 = vmatmul.f32.gmra.mxu0 %v59
    %v78 = vpop.f32.mrf.mxu0
    %v79 = vadd.f32 %v53, %v78
    %80 = vdwg.mxu0
    %81 = vmatpush.msra.mxu0 0.0
    %82 = vmatpush.msra.mxu0 0.0
    %83 = vmatpush.msra.mxu0 0.0
    %84 = vmatpush.msra.mxu0 0.0
    %85 = vmatpush.msra.mxu0 0.0
    %86 = vmatpush.msra.mxu0 0.0
    %87 = vmatpush.msra.mxu0 0.0
    %88 = vmatpush.msra.mxu0 0.0
    %89 = vmatpush.msra.mxu0 0.0
    %90 = vmatpush.msra.mxu0 0.0
    %91 = vmatpush.msra.mxu0 0.0
    %92 = vmatpush.msra.mxu0 0.0
    %93 = vmatpush.msra.mxu0 %v50
    %94 = vmatpush.msra.mxu0 %v48
    %95 = vmatpush.msra.mxu0 %v46
    %96 = vmatpush.msra.mxu0 %v44
    %97 = vmatmul.f32.gmra.mxu0 %v59
    %v98 = vpop.f32.mrf.mxu0
    %v99 = vadd.f32 %v54, %v98
    %100 = vdwg.mxu0
    %v101 = vmax.f32 %v79, 0.0
    %v102 = vmax.f32 %v99, 0.0
    %v103 = vld [vmem:[#allocation2] sm:$0xff]
    %v104 = vld [vmem:[#allocation2 + $0x8] sm:$0xff]
    %v105 = vld [vmem:[#allocation2 + $0x10] sm:$0xff]
    %v106 = vld [vmem:[#allocation2 + $0x18] sm:$0xff]
    %v107 = vld [vmem:[#allocation2 + $0x20] sm:$0xff]
    %v108 = vld [vmem:[#allocation2 + $0x28] sm:$0xff]
    %v109 = vld [vmem:[#allocation2 + $0x30] sm:$0xff]
    %v110 = vld [vmem:[#allocation2 + $0x38] sm:$0xff]
    %v111 = vld [vmem:[#allocation2 + $0x40] sm:$0xff]
    %v112 = vld [vmem:[#allocation2 + $0x48] sm:$0xff]
    %v113 = vld [vmem:[#allocation2 + $0x50] sm:$0xff]
    %v114 = vld [vmem:[#allocation2 + $0x58] sm:$0xff]
    %v115 = vld [vmem:[#allocation2 + $0x60] sm:$0xff]
    %v116 = vld [vmem:[#allocation2 + $0x68] sm:$0xff]
    %v117 = vld [vmem:[#allocation2 + $0x70] sm:$0xff]
    %v118 = vld [vmem:[#allocation2 + $0x78] sm:$0xff]
    %v119 = vld [vmem:[#allocation2 + $0x80] sm:$0xff]
    %v120 = vld [vmem:[#allocation2 + $0x88] sm:$0xff]
    %v121 = vld [vmem:[#allocation2 + $0x90] sm:$0xff]
    %v122 = vld [vmem:[#allocation2 + $0x98] sm:$0xff]
    %v123 = vld [vmem:[#allocation2 + $0xa0] sm:$0xff]
    %v124 = vld [vmem:[#allocation2 + $0xa8] sm:$0xff]
    %v125 = vld [vmem:[#allocation2 + $0xb0] sm:$0xff]
    %v126 = vld [vmem:[#allocation2 + $0xb8] sm:$0xff]
    %v127 = vld [vmem:[#allocation2 + $0xc0] sm:$0xff]
    %v128 = vld [vmem:[#allocation2 + $0xc8] sm:$0xff]
    %v129 = vld [vmem:[#allocation2 + $0xd0] sm:$0xff]
    %v130 = vld [vmem:[#allocation2 + $0xd8] sm:$0xff]
    %v131 = vld [vmem:[#allocation2 + $0xe0] sm:$0xff]
    %v132 = vld [vmem:[#allocation2 + $0xe8] sm:$0xff]
    %v133 = vld [vmem:[#allocation2 + $0xf0] sm:$0xff]
    %v134 = vld [vmem:[#allocation2 + $0xf8] sm:$0xff]
    %v135 = vld [vmem:[#allocation2 + $0x100] sm:$0xff]
    %v136 = vld [vmem:[#allocation2 + $0x108] sm:$0xff]
    %v137 = vld [vmem:[#allocation2 + $0x110] sm:$0xff]
    %v138 = vld [vmem:[#allocation2 + $0x118] sm:$0xff]
    %v139 = vld [vmem:[#allocation2 + $0x120] sm:$0xff]
    %v140 = vld [vmem:[#allocation2 + $0x128] sm:$0xff]
    %v141 = vld [vmem:[#allocation2 + $0x130] sm:$0xff]
    %v142 = vld [vmem:[#allocation2 + $0x138] sm:$0xff]
    %v143 = vld [vmem:[#allocation2 + $0x140] sm:$0xff]
    %v144 = vld [vmem:[#allocation2 + $0x148] sm:$0xff]
    %v145 = vld [vmem:[#allocation2 + $0x150] sm:$0xff]
    %v146 = vld [vmem:[#allocation2 + $0x158] sm:$0xff]
    %v147 = vld [vmem:[#allocation2 + $0x160] sm:$0xff]
    %v148 = vld [vmem:[#allocation2 + $0x168] sm:$0xff]
    %v149 = vld [vmem:[#allocation2 + $0x170] sm:$0xff]
    %v150 = vld [vmem:[#allocation2 + $0x178] sm:$0xff]
    %v151 = vld [vmem:[#allocation2 + $0x180] sm:$0xff]
    %v152 = vld [vmem:[#allocation2 + $0x188] sm:$0xff]
    %v153 = vld [vmem:[#allocation2 + $0x190] sm:$0xff]
    %v154 = vld [vmem:[#allocation2 + $0x198] sm:$0xff]
    %v155 = vld [vmem:[#allocation2 + $0x1a0] sm:$0xff]
    %v156 = vld [vmem:[#allocation2 + $0x1a8] sm:$0xff]
    %v157 = vld [vmem:[#allocation2 + $0x1b0] sm:$0xff]
    %v158 = vld [vmem:[#allocation2 + $0x1b8] sm:$0xff]
    %v159 = vld [vmem:[#allocation2 + $0x1c0] sm:$0xff]
    %v160 = vld [vmem:[#allocation2 + $0x1c8] sm:$0xff]
    %v161 = vld [vmem:[#allocation2 + $0x1d0] sm:$0xff]
    %v162 = vld [vmem:[#allocation2 + $0x1d8] sm:$0xff]
    %v163 = vld [vmem:[#allocation2 + $0x1e0] sm:$0xff]
    %v164 = vld [vmem:[#allocation2 + $0x1e8] sm:$0xff]
    %v165 = vld [vmem:[#allocation2 + $0x1f0] sm:$0xff]
    %v166 = vld [vmem:[#allocation2 + $0x1f8] sm:$0xff]
    %v167 = vld [vmem:[%s4] sm:$0x3]
    %v169 = vperm.slane %v167, 0
    %v170 = vperm.slane %v167, 1
    %173 = vmatpush.msra.mxu0 %v133
    %174 = vmatpush.msra.mxu0 %v131
    %175 = vmatpush.msra.mxu0 %v129
    %176 = vmatpush.msra.mxu0 %v127
    %177 = vmatpush.msra.mxu0 %v125
    %178 = vmatpush.msra.mxu0 %v123
    %179 = vmatpush.msra.mxu0 %v121
    %180 = vmatpush.msra.mxu0 %v119
    %181 = vmatpush.msra.mxu0 %v117
    %182 = vmatpush.msra.mxu0 %v115
    %183 = vmatpush.msra.mxu0 %v113
    %184 = vmatpush.msra.mxu0 %v111
    %185 = vmatpush.msra.mxu0 %v109
    %186 = vmatpush.msra.mxu0 %v107
    %187 = vmatpush.msra.mxu0 %v105
    %188 = vmatpush.msra.mxu0 %v103
    %189 = vmatmul.f32.gmra.mxu0 %v101
    %v190 = vpop.f32.mrf.mxu0
    %v191 = vadd.f32 %v169, %v190
    %192 = vdwg.mxu0
    %193 = vmatpush.msra.mxu0 %v165
    %194 = vmatpush.msra.mxu0 %v163
    %195 = vmatpush.msra.mxu0 %v161
    %196 = vmatpush.msra.mxu0 %v159
    %197 = vmatpush.msra.mxu0 %v157
    %198 = vmatpush.msra.mxu0 %v155
    %199 = vmatpush.msra.mxu0 %v153
    %200 = vmatpush.msra.mxu0 %v151
    %201 = vmatpush.msra.mxu0 %v149
    %202 = vmatpush.msra.mxu0 %v147
    %203 = vmatpush.msra.mxu0 %v145
    %204 = vmatpush.msra.mxu0 %v143
    %205 = vmatpush.msra.mxu0 %v141
    %206 = vmatpush.msra.mxu0 %v139
    %207 = vmatpush.msra.mxu0 %v137
    %208 = vmatpush.msra.mxu0 %v135
    %209 = vmatmul.f32.gmra.mxu0 %v102
    %v210 = vpop.f32.mrf.mxu0
    %v211 = vadd.f32 %v191, %v210
    %212 = vdwg.mxu0
    %213 = vmatpush.msra.mxu0 %v134
    %214 = vmatpush.msra.mxu0 %v132
    %215 = vmatpush.msra.mxu0 %v130
    %216 = vmatpush.msra.mxu0 %v128
    %217 = vmatpush.msra.mxu0 %v126
    %218 = vmatpush.msra.mxu0 %v124
    %219 = vmatpush.msra.mxu0 %v122
    %220 = vmatpush.msra.mxu0 %v120
    %221 = vmatpush.msra.mxu0 %v118
    %222 = vmatpush.msra.mxu0 %v116
    %223 = vmatpush.msra.mxu0 %v114
    %224 = vmatpush.msra.mxu0 %v112
    %225 = vmatpush.msra.mxu0 %v110
    %226 = vmatpush.msra.mxu0 %v108
    %227 = vmatpush.msra.mxu0 %v106
    %228 = vmatpush.msra.mxu0 %v104
    %229 = vmatmul.f32.gmra.mxu0 %v101
    %v230 = vpop.f32.mrf.mxu0
    %v231 = vadd.f32 %v170, %v230
    %232 = vdwg.mxu0
    %233 = vmatpush.msra.mxu0 %v166
    %234 = vmatpush.msra.mxu0 %v164
    %235 = vmatpush.msra.mxu0 %v162
    %236 = vmatpush.msra.mxu0 %v160
    %237 = vmatpush.msra.mxu0 %v158
    %238 = vmatpush.msra.mxu0 %v156
    %239 = vmatpush.msra.mxu0 %v154
    %240 = vmatpush.msra.mxu0 %v152
    %241 = vmatpush.msra.mxu0 %v150
    %242 = vmatpush.msra.mxu0 %v148
    %243 = vmatpush.msra.mxu0 %v146
    %244 = vmatpush.msra.mxu0 %v144
    %245 = vmatpush.msra.mxu0 %v142
    %246 = vmatpush.msra.mxu0 %v140
    %247 = vmatpush.msra.mxu0 %v138
    %248 = vmatpush.msra.mxu0 %v136
    %249 = vmatmul.f32.gmra.mxu0 %v102
    %v250 = vpop.f32.mrf.mxu0
    %v251 = vadd.f32 %v231, %v250
    %252 = vdwg.mxu0
    %v253 = vmax.f32 %v211, 0.0
    %v254 = vmax.f32 %v251, 0.0
    %v255 = vld [vmem:[%s5] sm:$0xff]
    %v256 = vld [vmem:[%s5 + $0x8] sm:$0xff]
    %v257 = vld [vmem:[%s5 + $0x10] sm:$0xff]
    %v258 = vld [vmem:[%s5 + $0x18] sm:$0xff]
    %v259 = vld [vmem:[%s5 + $0x20] sm:$0xff]
    %v260 = vld [vmem:[%s5 + $0x28] sm:$0xff]
    %v261 = vld [vmem:[%s5 + $0x30] sm:$0xff]
    %v262 = vld [vmem:[%s5 + $0x38] sm:$0xff]
    %v263 = vld [vmem:[%s5 + $0x40] sm:$0xff]
    %v264 = vld [vmem:[%s5 + $0x48] sm:$0xff]
    %v265 = vld [vmem:[%s5 + $0x50] sm:$0xff]
    %v266 = vld [vmem:[%s5 + $0x58] sm:$0xff]
    %v267 = vld [vmem:[%s5 + $0x60] sm:$0xff]
    %v268 = vld [vmem:[%s5 + $0x68] sm:$0xff]
    %v269 = vld [vmem:[%s5 + $0x70] sm:$0xff]
    %v270 = vld [vmem:[%s5 + $0x78] sm:$0xff]
    %v271 = vld [vmem:[%s5 + $0x80] sm:$0xff]
    %v272 = vld [vmem:[%s5 + $0x88] sm:$0xff]
    %v273 = vld [vmem:[%s5 + $0x90] sm:$0xff]
    %v274 = vld [vmem:[%s5 + $0x98] sm:$0xff]
    %v275 = vld [vmem:[%s5 + $0xa0] sm:$0xff]
    %v276 = vld [vmem:[%s5 + $0xa8] sm:$0xff]
    %v277 = vld [vmem:[%s5 + $0xb0] sm:$0xff]
    %v278 = vld [vmem:[%s5 + $0xb8] sm:$0xff]
    %v279 = vld [vmem:[%s5 + $0xc0] sm:$0xff]
    %v280 = vld [vmem:[%s5 + $0xc8] sm:$0xff]
    %v281 = vld [vmem:[%s5 + $0xd0] sm:$0xff]
    %v282 = vld [vmem:[%s5 + $0xd8] sm:$0xff]
    %v283 = vld [vmem:[%s5 + $0xe0] sm:$0xff]
    %v284 = vld [vmem:[%s5 + $0xe8] sm:$0xff]
    %v285 = vld [vmem:[%s5 + $0xf0] sm:$0xff]
    %v286 = vld [vmem:[%s5 + $0xf8] sm:$0xff]
    %v287 = vld [vmem:[%s6] sm:$0x1]
    %v289 = vperm.slane %v287, 0
    %291 = vmatpush.msra.mxu0 %v270
    %292 = vmatpush.msra.mxu0 %v269
    %293 = vmatpush.msra.mxu0 %v268
    %294 = vmatpush.msra.mxu0 %v267
    %295 = vmatpush.msra.mxu0 %v266
    %296 = vmatpush.msra.mxu0 %v265
    %297 = vmatpush.msra.mxu0 %v264
    %298 = vmatpush.msra.mxu0 %v263
    %299 = vmatpush.msra.mxu0 %v262
    %300 = vmatpush.msra.mxu0 %v261
    %301 = vmatpush.msra.mxu0 %v260
    %302 = vmatpush.msra.mxu0 %v259
    %303 = vmatpush.msra.mxu0 %v258
    %304 = vmatpush.msra.mxu0 %v257
    %305 = vmatpush.msra.mxu0 %v256
    %306 = vmatpush.msra.mxu0 %v255
    %307 = vmatmul.f32.gmra.mxu0 %v253
    %v308 = vpop.f32.mrf.mxu0
    %v309 = vadd.f32 %v289, %v308
    %310 = vdwg.mxu0
    %311 = vmatpush.msra.mxu0 %v286
    %312 = vmatpush.msra.mxu0 %v285
    %313 = vmatpush.msra.mxu0 %v284
    %314 = vmatpush.msra.mxu0 %v283
    %315 = vmatpush.msra.mxu0 %v282
    %316 = vmatpush.msra.mxu0 %v281
    %317 = vmatpush.msra.mxu0 %v280
    %318 = vmatpush.msra.mxu0 %v279
    %319 = vmatpush.msra.mxu0 %v278
    %320 = vmatpush.msra.mxu0 %v277
    %321 = vmatpush.msra.mxu0 %v276
    %322 = vmatpush.msra.mxu0 %v275
    %323 = vmatpush.msra.mxu0 %v274
    %324 = vmatpush.msra.mxu0 %v273
    %325 = vmatpush.msra.mxu0 %v272
    %326 = vmatpush.msra.mxu0 %v271
    %327 = vmatmul.f32.gmra.mxu0 %v254
    %v328 = vpop.f32.mrf.mxu0
    %v329 = vadd.f32 %v309, %v328
    %330 = vdwg.mxu0
    %v331 = vtanh.pop %v329
    %v332 = vmul.f32 %v331, 2.0
    %vm333 = vcmask 31744
    %334 = vst.msk [vmem:[%s7] sm:$0xff] %vm333, %v332
    // Predicated region
    $region34: #{policy_forward.1} parent=1 // pred_check
      _
    $region35: #{policy_forward.1} parent=1 // pred_check_branch
      %336 = sbr.rel (0) target = $region37
    $region36: #{policy_forward.1} parent=1 // pred_region
      _
    $region37: #{policy_forward.1} parent=1 // pred_fallthru
      _
    // Predicated region
    $region38: #{policy_forward.1} parent=1 // pred_check
      _
    $region39: #{policy_forward.1} parent=1 // pred_check_branch
      %338 = sbr.rel (0) target = $region41
    $region40: #{policy_forward.1} parent=1 // pred_region
      _
    $region41: #{policy_forward.1} parent=1 // pred_fallthru
      _
    %339 = vsyncpa [#allocation3], 1

</llo_original>
